<compile_context>
chip_gen: v6e
topology: v6e:2x2x1
jax: 0.10.0
libtpu: 0.0.40
codegen_flags: <defaults>
</compile_context>

<pallas_src>
import functools

import jax
import jax.numpy as jnp
from jax.experimental import pallas as pl
from jax.experimental.pallas import tpu as pltpu


_VMEM_LIMIT = 32 * 1024 * 1024       # scoped VMEM request; safe on v5e/v6e/v7x
_FUSED_BUDGET = 24 * 1024 * 1024     # per-step budget gate for the fused path
_TILE_BYTES_CAP = 4 * 1024 * 1024    # ~4 MiB of x per step in the 3-phase path


def _sublane_align(itemsize):
    # Sub-32-bit dtypes pack along sublanes: keep row tiles a multiple of the
    # packed-sublane count so stores stay unmasked / lane-dense.
    return {4: 8, 2: 16, 1: 32}.get(itemsize, 8)


def _round_up(n, m):
    return ((n + m - 1) // m) * m


def _choose_tile(total, align, cap):
    """Largest multiple of `align` that divides `total` (itself a multiple of
    `align`) and is <= cap; `total` when it already fits.  Never falls back to
    an oversized full-extent block."""
    if total <= cap:
        return total
    t = (cap // align) * align
    while t > align:
        if total % t == 0:
            return t
        t -= align
    return align


# ---------------------------------------------------------------------------
# Path A: fused pool + gate + multiply.  One grid axis over batch tiles.
# ---------------------------------------------------------------------------
def _fused_kernel(x_ref, wT_ref, b_ref, o_ref, *, inv_hw):
    x = x_ref[...]                                               # (bt, C, HW)
    pooled = jnp.sum(x.astype(jnp.float32), axis=-1) * inv_hw    # (bt, C) f32
    fc = jax.lax.dot_general(                                    # pooled @ W^T
        pooled, wT_ref[...],
        dimension_numbers=(((1,), (0,)), ((), ())),
        preferred_element_type=jnp.float32,
    )
    gate = jax.nn.sigmoid(fc + b_ref[...])                       # (bt, C) f32
    o_ref[...] = (x * gate.astype(x.dtype)[:, :, None]).astype(o_ref.dtype)


def _fused_step_bytes(bt, C, HW, itemsize):
    slab = bt * C * HW * itemsize
    # 2x double-buffered input + 2x double-buffered output + one f32 compute
    # temporary of the block + double-buffered weight/bias.
    return 4 * slab + bt * C * HW * 4 + 2 * (C * C * 4 + C * 4)


def _pick_batch_tile(B, C, HW, itemsize, budget):
    for bt in range(B, 0, -1):
        if B % bt:
            continue
        if _fused_step_bytes(bt, C, HW, itemsize) > budget:
            continue
        if B >= 2 and B // bt < 2:
            continue   # keep >= 2 parallel grid steps for v7x's two TensorCores
        return bt
    return None


def _fused_path(x, wT, bias2, bt, donate_x):
    B, C, H, W = x.shape
    HW = H * W
    itemsize = jnp.dtype(x.dtype).itemsize
    x3 = x.reshape(B, C, HW)

    extra = {"input_output_aliases": {0: 0}} if donate_x else {}

    out3 = pl.pallas_call(
        functools.partial(_fused_kernel, inv_hw=float(1.0 / HW)),
        out_shape=jax.ShapeDtypeStruct((B, C, HW), x.dtype),
        grid_spec=pltpu.PrefetchScalarGridSpec(
            num_scalar_prefetch=0,
            grid=(B // bt,),
            in_specs=[
                pl.BlockSpec((bt, C, HW), lambda i: (i, 0, 0)),
                pl.BlockSpec((C, C), lambda i: (0, 0)),
                pl.BlockSpec((1, C), lambda i: (0, 0)),
            ],
            out_specs=pl.BlockSpec((bt, C, HW), lambda i: (i, 0, 0)),
        ),
        compiler_params=pltpu.CompilerParams(
            dimension_semantics=("parallel",),
            vmem_limit_bytes=_VMEM_LIMIT),
        cost_estimate=pl.CostEstimate(
            flops=int(2 * B * C * HW + 2 * B * C * C),
            transcendentals=int(B * C),
            bytes_accessed=int(2 * B * C * HW * itemsize + C * C * 4 + C * 4)),
        **extra,
    )(x3, wT, bias2)
    return out3.reshape(B, C, H, W)


# ---------------------------------------------------------------------------
# Path B kernels: tiled pool partial sums + tiled broadcast multiply.
# ---------------------------------------------------------------------------
def _row_sum_kernel(x_ref, s_ref):
    @pl.when(pl.program_id(1) == 0)
    def _():
        s_ref[...] = jnp.zeros_like(s_ref)

    s_ref[...] += jnp.sum(x_ref[...].astype(jnp.float32), axis=-1, keepdims=True)


def _gate_mul_kernel(x_ref, g_ref, o_ref):
    # gate arrives pre-cast to x's dtype as a (tile_r, 1) column -> lane splat.
    o_ref[...] = x_ref[...] * g_ref[...]


def _three_phase_path(x, wT, bias2, tile_bytes_cap, row_tile_cap, hw_tile_cap,
                      donate_x):
    B, C, H, W = x.shape
    HW = H * W
    R = B * C
    dtype = x.dtype
    itemsize = jnp.dtype(dtype).itemsize
    sub_align = _sublane_align(itemsize)

    R_pad = _round_up(R, sub_align)
    HW_pad = _round_up(HW, 128)

    x2d = x.reshape(R, HW)
    if (R_pad, HW_pad) != (R, HW):
        # Zero padding is harmless for the pooled sum (we divide by the true
        # HW); padded rows/cols are cropped after the multiply.
        x2d = jnp.pad(x2d, ((0, R_pad - R), (0, HW_pad - HW)))

    tile_hw = _choose_tile(HW_pad, 128, hw_tile_cap)
    max_r_by_bytes = max(
        sub_align,
        (tile_bytes_cap // (tile_hw * itemsize)) // sub_align * sub_align)
    tile_r = _choose_tile(R_pad, sub_align, min(row_tile_cap, max_r_by_bytes))
    grid_rows = R_pad // tile_r
    if grid_rows == 1 and R_pad >= 2 * sub_align:
        # v7x megacore: make the parallel row axis span both TensorCores.
        half = max(sub_align, (R_pad // 2) // sub_align * sub_align)
        tile_r = _choose_tile(R_pad, sub_align, half)
        grid_rows = R_pad // tile_r
    grid_hw = HW_pad // tile_hw

    # ---- Phase 1: pooled sums (R_pad, 1), f32 accumulation ----------------
    sums = pl.pallas_call(
        _row_sum_kernel,
        out_shape=jax.ShapeDtypeStruct((R_pad, 1), jnp.float32),
        grid_spec=pltpu.PrefetchScalarGridSpec(
            num_scalar_prefetch=0,
            grid=(grid_rows, grid_hw),
            in_specs=[pl.BlockSpec((tile_r, tile_hw), lambda i, k: (i, k))],
            out_specs=pl.BlockSpec((tile_r, 1), lambda i, k: (i, 0)),
        ),
        compiler_params=pltpu.CompilerParams(
            dimension_semantics=("parallel", "arbitrary"),
            vmem_limit_bytes=_VMEM_LIMIT),
        cost_estimate=pl.CostEstimate(
            flops=int(R_pad * HW_pad),
            transcendentals=0,
            bytes_accessed=int(R_pad * HW_pad * itemsize + R_pad * 4)),
    )(x2d)

    # ---- Phase 2: tiny (B,C)@(C,C) gate in plain jnp ----------------------
    pooled = sums[:R].reshape(B, C) * jnp.float32(1.0 / HW)
    gate = jax.nn.sigmoid(pooled @ wT + bias2)                  # (B, C) f32
    gate_col = gate.astype(dtype).reshape(R, 1)
    if R_pad != R:
        gate_col = jnp.pad(gate_col, ((0, R_pad - R), (0, 0)))

    # ---- Phase 3: tiled, lane-dense out = x * gate ------------------------
    extra = {"input_output_aliases": {0: 0}} if donate_x else {}
    out2d = pl.pallas_call(
        _gate_mul_kernel,
        out_shape=jax.ShapeDtypeStruct((R_pad, HW_pad), dtype),
        grid_spec=pltpu.PrefetchScalarGridSpec(
            num_scalar_prefetch=0,
            grid=(grid_rows, grid_hw),
            in_specs=[
                pl.BlockSpec((tile_r, tile_hw), lambda i, j: (i, j)),
                pl.BlockSpec((tile_r, 1), lambda i, j: (i, 0)),
            ],
            out_specs=pl.BlockSpec((tile_r, tile_hw), lambda i, j: (i, j)),
        ),
        compiler_params=pltpu.CompilerParams(
            dimension_semantics=("parallel", "parallel"),
            vmem_limit_bytes=_VMEM_LIMIT),
        cost_estimate=pl.CostEstimate(
            flops=int(R_pad * HW_pad),
            transcendentals=0,
            bytes_accessed=int(2 * R_pad * HW_pad * itemsize + R_pad * itemsize)),
        **extra,
    )(x2d, gate_col)

    if (R_pad, HW_pad) != (R, HW):
        out2d = out2d[:R, :HW]
    return out2d.reshape(B, C, H, W)


# ---------------------------------------------------------------------------
# Public entry point.
# ---------------------------------------------------------------------------
def channel_attention(x, weight, bias, *,
                      fused_budget_bytes=_FUSED_BUDGET,
                      tile_bytes_cap=_TILE_BYTES_CAP,
                      row_tile_cap=512,
                      hw_tile_cap=4096,
                      donate_x=False):
    """x: (B, C, H, W); weight: (C, C) = (out_ch, in_ch); bias: (C,)."""
    B, C, H, W = x.shape
    HW = H * W
    itemsize = jnp.dtype(x.dtype).itemsize

    # Pre-transpose the 1x1-conv weight once -> plain (no trans-B) contraction.
    wT = jnp.transpose(weight).astype(jnp.float32)   # (in_ch, out_ch)
    bias2 = bias.astype(jnp.float32).reshape(1, C)

    bt = _pick_batch_tile(B, C, HW, itemsize, fused_budget_bytes)
    if bt is not None:
        return _fused_path(x, wT, bias2, bt, donate_x)
    return _three_phase_path(x, wT, bias2, tile_bytes_cap, row_tile_cap,
                             hw_tile_cap, donate_x)


def _reference(x, weight, bias):
    # Pure-JAX reference matching the PyTorch forward.
    pooled = jnp.mean(x, axis=(2, 3), keepdims=True)                  # (B,C,1,1)
    fc = jnp.einsum("oc,bcxy->boxy", weight, pooled) + bias.reshape(1, -1, 1, 1)
    return x * jax.nn.sigmoid(fc)


if __name__ == "__main__":
    key = jax.random.PRNGKey(0)
    k_x, k_w, k_b, k_x2 = jax.random.split(key, 4)

    B, C, H, W = 2, 4, 16, 16
    x = jax.random.normal(k_x, (B, C, H, W), dtype=jnp.float32)

    # Deterministic Conv2d(C, C, 1) params (kaiming-uniform-ish scale).
    fan_in = C  # 1x1 kernel
    bound = 1.0 / (fan_in ** 0.5)
    weight = jax.random.uniform(k_w, (C, C), jnp.float32, -bound, bound)
    bias = jax.random.uniform(k_b, (C,), jnp.float32, -bound, bound)

    ref = _reference(x, weight, bias)

    # Path A: fused single-kernel (default for VMEM-resident slabs).
    out_fused = jax.block_until_ready(channel_attention(x, weight, bias))
    assert out_fused.shape == (B, C, H, W)
    assert jnp.allclose(out_fused, ref, atol=1e-4, rtol=1e-4), "fused mismatch"

    # Path B: 3-phase fallback, forced by a zero fused budget.
    out_split = jax.block_until_ready(
        channel_attention(x, weight, bias, fused_budget_bytes=0))
    assert jnp.allclose(out_split, ref, atol=1e-4, rtol=1e-4), "3-phase mismatch"

    # Non-(8,128)-aligned shape: exercises the full-extent fused block and the
    # pad/crop robustness path of the fallback.
    B2, C2, H2, W2 = 2, 3, 15, 15
    x2 = jax.random.normal(k_x2, (B2, C2, H2, W2), dtype=jnp.float32)
    w2 = jax.random.uniform(k_w, (C2, C2), jnp.float32, -bound, bound)
    b2 = jax.random.uniform(k_b, (C2,), jnp.float32, -bound, bound)
    ref2 = _reference(x2, w2, b2)
    o2a = jax.block_until_ready(channel_attention(x2, w2, b2))
    o2b = jax.block_until_ready(
        channel_attention(x2, w2, b2, fused_budget_bytes=0))
    assert jnp.allclose(o2a, ref2, atol=1e-4, rtol=1e-4), "fused mismatch (unaligned)"
    assert jnp.allclose(o2b, ref2, atol=1e-4, rtol=1e-4), "3-phase mismatch (unaligned)"

    print("KERNEL_OK")
</pallas_src>

<mosaic_0001>
module attributes {stable_mosaic.version = 11 : i64} {
  func.func @_fused_kernel(%arg0: i32, %arg1: memref<1x4x256xf32, #tpu.memory_space<vmem>>, %arg2: memref<4x4xf32, #tpu.memory_space<vmem>>, %arg3: memref<1x4xf32, #tpu.memory_space<vmem>>, %arg4: memref<1x4x256xf32, #tpu.memory_space<vmem>>) attributes {dimension_semantics = [#tpu.dimension_semantics<parallel>], iteration_bounds = array<i64: 2>, scalar_prefetch = 0 : i64, scratch_operands = 0 : i64, tpu.core_type = #tpu.core_type<tc>, window_params = [{transform_indices = @transform_0, window_bounds = array<i64: 1, 4, 256>}, {pipeline_mode = #tpu.pipeline_mode<synchronous>, transform_indices = @transform_1, window_bounds = array<i64: 4, 4>}, {pipeline_mode = #tpu.pipeline_mode<synchronous>, transform_indices = @transform_2, window_bounds = array<i64: 1, 4>}, {transform_indices = @transform_3, window_bounds = array<i64: 1, 4, 256>}]} {
    %c0 = arith.constant 0 : index
    %c0_0 = arith.constant 0 : index
    %c0_1 = arith.constant 0 : index
    %0 = vector.load %arg1[%c0, %c0_0, %c0_1] : memref<1x4x256xf32, #tpu.memory_space<vmem>>, vector<1x4x256xf32>
    %cst = arith.constant dense<0.000000e+00> : vector<1x4xf32>
    %1 = vector.multi_reduction <add>, %0, %cst [2] : vector<1x4x256xf32> to vector<1x4xf32>
    %cst_2 = arith.constant 3.906250e-03 : f32
    %2 = vector.broadcast %cst_2 : f32 to vector<1x4xf32>
    %3 = arith.mulf %1, %2 : vector<1x4xf32>
    %c0_3 = arith.constant 0 : index
    %c0_4 = arith.constant 0 : index
    %4 = vector.load %arg2[%c0_3, %c0_4] : memref<4x4xf32, #tpu.memory_space<vmem>>, vector<4x4xf32>
    %cst_5 = arith.constant dense<0.000000e+00> : vector<1x4xf32>
    %5 = tpu.matmul %3, %4, %cst_5 {dimension_numbers = #tpu.dot_dimension_numbers<[1], [0], [0], [1], [0, 0, 1, 1], [], []>} : vector<1x4xf32>, vector<4x4xf32>, vector<1x4xf32> -> vector<1x4xf32>
    %c0_6 = arith.constant 0 : index
    %c0_7 = arith.constant 0 : index
    %6 = vector.load %arg3[%c0_6, %c0_7] : memref<1x4xf32, #tpu.memory_space<vmem>>, vector<1x4xf32>
    %7 = arith.addf %5, %6 : vector<1x4xf32>
    %8 = arith.negf %7 : vector<1x4xf32>
    %9 = math.exp %8 : vector<1x4xf32>
    %cst_8 = arith.constant 1.000000e+00 : f32
    %10 = vector.broadcast %cst_8 : f32 to vector<1x4xf32>
    %11 = arith.addf %10, %9 : vector<1x4xf32>
    %12 = arith.divf %10, %11 : vector<1x4xf32>
    %13 = vector.shape_cast %12 : vector<1x4xf32> to vector<1x4x1xf32>
    %14 = vector.broadcast %13 : vector<1x4x1xf32> to vector<1x4x256xf32>
    %15 = arith.mulf %0, %14 : vector<1x4x256xf32>
    %c0_9 = arith.constant 0 : index
    %c0_10 = arith.constant 0 : index
    %c0_11 = arith.constant 0 : index
    %16 = vector.load %arg4[%c0_9, %c0_10, %c0_11] : memref<1x4x256xf32, #tpu.memory_space<vmem>>, vector<1x4x256xf32>
    tpu.vector_store %arg4[%c0_9, %c0_10, %c0_11], %15 {strides = array<i32>} : memref<1x4x256xf32, #tpu.memory_space<vmem>>, vector<1x4x256xf32>,
    return
  }
  func.func @transform_0(%arg0: i32) -> (i32, i32, i32) {
    %c0_i32 = arith.constant 0 : i32
    %c0_i32_0 = arith.constant 0 : i32
    %c0_i32_1 = arith.constant 0 : i32
    return %arg0, %c0_i32, %c0_i32_0 : i32, i32, i32
  }
  func.func @transform_1(%arg0: i32) -> (i32, i32) {
    %c0_i32 = arith.constant 0 : i32
    %c0_i32_0 = arith.constant 0 : i32
    %c0_i32_1 = arith.constant 0 : i32
    return %c0_i32, %c0_i32_0 : i32, i32
  }
  func.func @transform_2(%arg0: i32) -> (i32, i32) {
    %c0_i32 = arith.constant 0 : i32
    %c0_i32_0 = arith.constant 0 : i32
    %c0_i32_1 = arith.constant 0 : i32
    return %c0_i32, %c0_i32_0 : i32, i32
  }
  func.func @transform_3(%arg0: i32) -> (i32, i32, i32) {
    %c0_i32 = arith.constant 0 : i32
    %c0_i32_0 = arith.constant 0 : i32
    %c0_i32_1 = arith.constant 0 : i32
    return %arg0, %c0_i32, %c0_i32_0 : i32, i32, i32
  }
}

</mosaic_0001>

<llo_original>
// kernel: tpu_custom_call.1
$region0: #{tpu_custom_call.1}
  #allocation0 [shape = 'u32[]', space=smem, size = 0x4, offset = 0x4, fixed_abs, tag = 'smem constant byte address 0x4 - core index']
  #allocation1 [shape = 'u32[144,128]{1,0:T(1,128)}', space=vmem, size = 0x12000, scoped, tag = 'internal scratch']
  %s0 = inlined_call_operand.hbm [shape: f32[2,4,256], index: 0, kind: input, shape index: {}]
  %s1 = inlined_call_operand.hbm [shape: f32[4,4], index: 1, kind: input, shape index: {}]
  %s2 = inlined_call_operand.vmem [shape: f32[1,4], index: 2, kind: input, shape index: {}]
  %s3 = inlined_call_operand.hbm [shape: f32[2,4,256], index: 3, kind: output, shape index: {}]
  %s4 = sld [smem:[#allocation0]]
  $region53: #{tpu_custom_call.1} parent=0
    _
  %s6 = ssub.s32 1, %s4
  %s7 = scalar_select 0, %s6, %s4
  $region1: #{tpu_custom_call.1} parent=0
    #allocation2 [shape = 'u8[8192]{0}', space=vmem, size = 0x2000, scoped, tag = 'input window, operand 0']
    #allocation3 [shape = 's32[2]{0}', space=sflag, size = 0x8, scoped, tag = 'scoped memory for tpu_custom_call.1']
    #allocation4 [shape = 's32[2]{0}', space=sflag, size = 0x8, scoped, tag = 'scoped memory for tpu_custom_call.1']
    #allocation5 [shape = 'u8[2048]{0}', space=vmem, size = 0x800, scoped, tag = 'input window, operand 1, single buffered']
    #allocation6 [shape = 's32[1]{0}', space=sflag, size = 0x4, scoped, tag = 'scoped memory for tpu_custom_call.1']
    #allocation7 [shape = 'u8[8192]{0}', space=vmem, size = 0x2000, scoped, tag = 'output window, operand 0']
    %8 = vsyncpa [#allocation3], 0
    %s9 = scalar_lea.sflag [#allocation3], 1
    %10 = vsyncpa %s9, 0
    %11 = vsyncpa [#allocation6], 0
    %12 = vsyncpa [#allocation4], 0
    %s13 = scalar_lea.sflag [#allocation4], 1
    %14 = vsyncpa %s13, 0
    loop: start=0, step=1, limit=4
    $region2: #{tpu_custom_call.1} parent=1 // loop_pre_header
      _
    $region3: #{tpu_custom_call.1} parent=1 // loop_header
      %s16 = sphi 0, %s20
      %p17 = scmp.ge.s32.totalorder %s16, 4
      %s26 = sphi 0, %s28
      %s29 = sphi 0, %s26
      %s30 = sphi 0, %s29
      %s46 = sphi 0, %s30
      %s50 = sphi 0, %s50
      %s52 = sphi 0, %s50
      %s53 = sphi 0, %s52
      %s67 = sphi 0, %s53
      %s71 = sphi 0, %s71
      %s73 = sphi 0, %s71
      %s74 = sphi 0, %s73
      %s88 = sphi 0, %s74
      %s94 = sphi 0, %s96
      %s97 = sphi 0, %s94
      %s98 = sphi 0, %s97
      %s114 = sphi 0, %s98
    $region4: #{tpu_custom_call.1} parent=1 // loop_header_branch
      %19 = sbr.rel (%p17) target = $region8
    $region5: #{tpu_custom_call.1} parent=1 // loop_body
      %s21 = ssub.s32 %s16, 1
      %s22 = ssub.s32 %s16, 2
      %s23 = sadd.s32 %s16, 1
      %s24 = ssub.s32 %s16, %s23
      %p25 = scmp.eq.s32.totalorder %s24, 0
      %s27 = sadd.s32 %s26, 1
      %s28 = scalar_select %p25, %s26, %s27
      %p31 = pneg %p25
      %p32 = scmp.eq.s32.totalorder %s16, 1
      %p33 = por %p31, %p32
      %p34 = scmp.ne.s32.totalorder %s26, %s29
      %p35 = scmp.eq.s32.totalorder %s16, 0
      %p36 = por %p34, %p35
      %p37 = scmp.ne.s32.totalorder %s26, %s29
      %p38 = scmp.eq.s32.totalorder %s21, 1
      %p39 = por %p37, %p38
      %p40 = scmp.ne.s32.totalorder %s29, %s30
      %p41 = scmp.eq.s32.totalorder %s21, 0
      %p42 = por %p40, %p41
      %p43 = scmp.ne.s32.totalorder %s29, %s30
      %p44 = scmp.eq.s32.totalorder %s22, 1
      %p45 = por %p43, %p44
      %p47 = scmp.ne.s32.totalorder %s30, %s46
      %p48 = scmp.eq.s32.totalorder %s22, 0
      %p49 = por %p47, %p48
      %s51 = sadd.s32 %s50, 1
      %p54 = scmp.eq.s32.totalorder %s16, 1
      %p55 = scmp.ne.s32.totalorder %s50, %s52
      %p56 = scmp.eq.s32.totalorder %s16, 0
      %p57 = por %p55, %p56
      %p58 = scmp.ne.s32.totalorder %s50, %s52
      %p59 = scmp.eq.s32.totalorder %s21, 1
      %p60 = por %p58, %p59
      %p61 = scmp.ne.s32.totalorder %s52, %s53
      %p62 = scmp.eq.s32.totalorder %s21, 0
      %p63 = por %p61, %p62
      %p64 = scmp.ne.s32.totalorder %s52, %s53
      %p65 = scmp.eq.s32.totalorder %s22, 1
      %p66 = por %p64, %p65
      %p68 = scmp.ne.s32.totalorder %s53, %s67
      %p69 = scmp.eq.s32.totalorder %s22, 0
      %p70 = por %p68, %p69
      %s72 = sadd.s32 %s71, 1
      %p75 = scmp.eq.s32.totalorder %s16, 1
      %p76 = scmp.ne.s32.totalorder %s71, %s73
      %p77 = scmp.eq.s32.totalorder %s16, 0
      %p78 = por %p76, %p77
      %p79 = scmp.ne.s32.totalorder %s71, %s73
      %p80 = scmp.eq.s32.totalorder %s21, 1
      %p81 = por %p79, %p80
      %p82 = scmp.ne.s32.totalorder %s73, %s74
      %p83 = scmp.eq.s32.totalorder %s21, 0
      %p84 = por %p82, %p83
      %p85 = scmp.ne.s32.totalorder %s73, %s74
      %p86 = scmp.eq.s32.totalorder %s22, 1
      %p87 = por %p85, %p86
      %p89 = scmp.ne.s32.totalorder %s74, %s88
      %p90 = scmp.eq.s32.totalorder %s22, 0
      %p91 = por %p89, %p90
      %s92 = ssub.s32 %s16, %s23
      %p93 = scmp.eq.s32.totalorder %s92, 0
      %s95 = sadd.s32 %s94, 1
      %s96 = scalar_select %p93, %s94, %s95
      %p99 = pneg %p93
      %p100 = scmp.eq.s32.totalorder %s16, 1
      %p101 = por %p99, %p100
      %p102 = scmp.ne.s32.totalorder %s94, %s97
      %p103 = scmp.eq.s32.totalorder %s16, 0
      %p104 = por %p102, %p103
      %p105 = scmp.ne.s32.totalorder %s94, %s97
      %p106 = scmp.eq.s32.totalorder %s21, 1
      %p107 = por %p105, %p106
      %p108 = scmp.ne.s32.totalorder %s97, %s98
      %p109 = scmp.eq.s32.totalorder %s21, 0
      %p110 = por %p108, %p109
      %p111 = scmp.ne.s32.totalorder %s97, %s98
      %p112 = scmp.eq.s32.totalorder %s22, 1
      %p113 = por %p111, %p112
      %p115 = scmp.ne.s32.totalorder %s98, %s114
      %p116 = scmp.eq.s32.totalorder %s22, 0
      %p117 = por %p115, %p116
      %p118 = scmp.le.s32.totalorder 1, %s16
      %p119 = scmp.lt.s32.totalorder %s16, 3
      %p120 = pnand %p118, %p119
      %p121 = pneg %p120
      // Predicated region
      $region9: #{tpu_custom_call.1} parent=5 // pred_check
        _
      $region10: #{tpu_custom_call.1} parent=5 // pred_check_branch
        %123 = sbr.rel (%p120) target = $region12
      $region11: #{tpu_custom_call.1} parent=5 // pred_region
        %s124 = ssub.s32 %s16, 1
        // Predicated region
        $region13: #{tpu_custom_call.1} parent=11 // pred_check
          %p125 = pneg %p63
        $region14: #{tpu_custom_call.1} parent=11 // pred_check_branch
          %127 = sbr.rel (%p125) target = $region16
        $region15: #{tpu_custom_call.1} parent=11 // pred_region
          %s129 = ssub.s32 64, 64
          %130 = vsyncadd [#allocation6], %s129
          %s132 = sshll.u32 [#allocation5], 4
          %s133 = int_to_ptr.vmem [resolvable:$true] %s132
          %135 = dma.hbm_to_vmem [thread:$0]  %s1, 64, %s133, [#allocation6]
        $region16: #{tpu_custom_call.1} parent=11 // pred_fallthru
          _
        // Predicated region
        $region17: #{tpu_custom_call.1} parent=11 // pred_check
          %p136 = pneg %p84
        $region18: #{tpu_custom_call.1} parent=11 // pred_check_branch
          %138 = sbr.rel (%p136) target = $region20
        $region19: #{tpu_custom_call.1} parent=11 // pred_region
          _
        $region20: #{tpu_custom_call.1} parent=11 // pred_fallthru
          _
      $region12: #{tpu_custom_call.1} parent=5 // pred_fallthru
        _
      %p139 = scmp.lt.s32.totalorder %s16, 2
      // Predicated region
      $region21: #{tpu_custom_call.1} parent=5 // pred_check
        %p140 = pneg %p139
      $region22: #{tpu_custom_call.1} parent=5 // pred_check_branch
        %142 = sbr.rel (%p140) target = $region24
      $region23: #{tpu_custom_call.1} parent=5 // pred_region
        // Predicated region
        $region25: #{tpu_custom_call.1} parent=23 // pred_check
          %p143 = pneg %p36
        $region26: #{tpu_custom_call.1} parent=23 // pred_check_branch
          %145 = sbr.rel (%p143) target = $region28
        $region27: #{tpu_custom_call.1} parent=23 // pred_region
          %s146 = sand.u32 %s26, 1
          %s147 = scalar_lea.sflag [#allocation3], %s146
          %s148 = sand.u32 %s26, 1
          %s149 = smul.addr %s148, 8
          %s150 = scalar_lea.vmem [#allocation2], %s149
          %s152 = ssub.s32 128, 128
          %153 = vsyncadd %s147, %s152
          %s154 = smul.addr %s16, 2
          %s155 = smul.addr %s154, 64
          %s156 = scalar_lea.hbm %s0, %s155
          %s158 = sshll.u32 %s150, 4
          %s159 = int_to_ptr.vmem [resolvable:$true] %s158
          %161 = dma.hbm_to_vmem [thread:$0]  %s156, 128, %s159, %s147
        $region28: #{tpu_custom_call.1} parent=23 // pred_fallthru
          _
      $region24: #{tpu_custom_call.1} parent=5 // pred_fallthru
        _
      %p162 = scmp.le.s32.totalorder 1, %s16
      %p163 = scmp.lt.s32.totalorder %s16, 3
      %p164 = pnand %p162, %p163
      %p165 = pneg %p164
      // Predicated region
      $region29: #{tpu_custom_call.1} parent=5 // pred_check
        _
      $region30: #{tpu_custom_call.1} parent=5 // pred_check_branch
        %167 = sbr.rel (%p164) target = $region32
      $region31: #{tpu_custom_call.1} parent=5 // pred_region
        %s168 = ssub.s32 %s16, 1
        %s169 = sand.u32 %s29, 1
        %s170 = scalar_lea.sflag [#allocation3], %s169
        %s171 = sand.u32 %s29, 1
        %s172 = smul.addr %s171, 8
        %s173 = scalar_lea.vmem [#allocation2], %s172
        // Predicated region
        $region33: #{tpu_custom_call.1} parent=31 // pred_check
          %p174 = pneg %p42
        $region34: #{tpu_custom_call.1} parent=31 // pred_check_branch
          %176 = sbr.rel (%p174) target = $region36
        $region35: #{tpu_custom_call.1} parent=31 // pred_region
          %177 = dma.done %s170, 128
        $region36: #{tpu_custom_call.1} parent=31 // pred_fallthru
          _
        // Predicated region
        $region37: #{tpu_custom_call.1} parent=31 // pred_check
          %p178 = pneg %p63
        $region38: #{tpu_custom_call.1} parent=31 // pred_check_branch
          %180 = sbr.rel (%p178) target = $region40
        $region39: #{tpu_custom_call.1} parent=31 // pred_region
          %181 = dma.done [#allocation6], 64
        $region40: #{tpu_custom_call.1} parent=31 // pred_fallthru
          _
        %s182 = sand.u32 %s29, 1
        %s183 = scalar_lea.sflag [#allocation3], %s182
        %s184 = sand.u32 %s29, 1
        %s185 = smul.addr %s184, 8
        %s186 = scalar_lea.vmem [#allocation2], %s185
        %p187 = pneg %p42
        %p188 = pneg %p39
        %p189 = pneg %p63
        %p190 = pneg %p60
        %p191 = pneg %p84
        %p192 = pneg %p81
        %p193 = pneg %p110
        %p194 = pneg %p107
        %s195 = sand.u32 %s97, 1
        %s196 = scalar_lea.sflag [#allocation4], %s195
        %s197 = sand.u32 %s97, 1
        %s198 = smul.addr %s197, 8
        %s199 = scalar_lea.vmem [#allocation7], %s198
        %v200 = vld [vmem:[%s173] sm:$0xff]
        %v202 = vcombine.high %v200, %v200
        %vm204 = vcmask 1043456
        %v205 = vsel %vm204, %v200, 0.0
        %v206 = vsel %vm204, %v202, 0.0
        %v207 = vadd.f32 %v205, %v206
        %208 = vadd.xlane.f32.xlu0 %v207
        %v209 = vpop.xlane.xlu0 %208
        %v210 = vmul.f32 %v209, 0.00390625
        %v211 = vld [vmem:[#allocation5] sm:$0xf]
        %v212 = vld [vmem:[%s2] sm:$0x1]
        %v214 = vlaneseq
        %v215 = vand.u32 %v214, 127
        %v216 = vlaneseq
        %v217 = vshrl.u32 %v216, 7
        %v218 = vsub.s32 %v215, %v217
        %v219 = vrot.slane %v210, %v218
        %vm220 = vcmask 31744
        %v221 = vsel %vm220, %v219, 0
        %v224 = vsel %vm204, %v211, 0
        %226 = vmatprep.subr.mxu0 0.0
        %227 = vmatpush1.msra.mxu0 0.0
        %228 = vmatprep.subr.mxu0 0.0
        %229 = vmatpush1.msra.mxu0 0.0
        %230 = vmatprep.subr.mxu0 0.0
        %231 = vmatpush1.msra.mxu0 0.0
        %232 = vmatprep.subr.mxu0 0.0
        %233 = vmatpush1.msra.mxu0 0.0
        %234 = vmatprep.subr.mxu0 0.0
        %235 = vmatpush1.msra.mxu0 0.0
        %236 = vmatprep.subr.mxu0 0.0
        %237 = vmatpush1.msra.mxu0 0.0
        %238 = vmatprep.subr.mxu0 0.0
        %239 = vmatpush1.msra.mxu0 0.0
        %240 = vmatprep.subr.mxu0 0.0
        %241 = vmatpush1.msra.mxu0 0.0
        %242 = vmatprep.subr.mxu0 0.0
        %243 = vmatpush1.msra.mxu0 0.0
        %244 = vmatprep.subr.mxu0 0.0
        %245 = vmatpush1.msra.mxu0 0.0
        %246 = vmatprep.subr.mxu0 0.0
        %247 = vmatpush1.msra.mxu0 0.0
        %248 = vmatprep.subr.mxu0 0.0
        %249 = vmatpush1.msra.mxu0 0.0
        %250 = vmatprep.subr.mxu0 0.0
        %251 = vmatpush1.msra.mxu0 0.0
        %252 = vmatprep.subr.mxu0 0.0
        %253 = vmatpush1.msra.mxu0 0.0
        %254 = vmatprep.subr.mxu0 0.0
        %255 = vmatpush1.msra.mxu0 0.0
        %256 = vmatprep.subr.mxu0 0.0
        %257 = vmatpush1.msra.mxu0 %v224
        %258 = vmatprep.subr.mxu0 0.0
        %259 = vmatpush2.msra.mxu0 0.0
        %260 = vmatprep.subr.mxu0 0.0
        %261 = vmatpush2.msra.mxu0 0.0
        %262 = vmatprep.subr.mxu0 0.0
        %263 = vmatpush2.msra.mxu0 0.0
        %264 = vmatprep.subr.mxu0 0.0
        %265 = vmatpush2.msra.mxu0 0.0
        %266 = vmatprep.subr.mxu0 0.0
        %267 = vmatpush2.msra.mxu0 0.0
        %268 = vmatprep.subr.mxu0 0.0
        %269 = vmatpush2.msra.mxu0 0.0
        %270 = vmatprep.subr.mxu0 0.0
        %271 = vmatpush2.msra.mxu0 0.0
        %272 = vmatprep.subr.mxu0 0.0
        %273 = vmatpush2.msra.mxu0 0.0
        %274 = vmatprep.subr.mxu0 0.0
        %275 = vmatpush2.msra.mxu0 0.0
        %276 = vmatprep.subr.mxu0 0.0
        %277 = vmatpush2.msra.mxu0 0.0
        %278 = vmatprep.subr.mxu0 0.0
        %279 = vmatpush2.msra.mxu0 0.0
        %280 = vmatprep.subr.mxu0 0.0
        %281 = vmatpush2.msra.mxu0 0.0
        %282 = vmatprep.subr.mxu0 0.0
        %283 = vmatpush2.msra.mxu0 0.0
        %284 = vmatprep.subr.mxu0 0.0
        %285 = vmatpush2.msra.mxu0 0.0
        %286 = vmatprep.subr.mxu0 0.0
        %287 = vmatpush2.msra.mxu0 0.0
        %288 = vmatprep.subr.mxu0 0.0
        %289 = vmatpush2.msra.mxu0 0.0
        %290 = vmatprep.mubr.f32.mxu0 0.0
        %291 = vmatmul.mubr.f32.gmra.mxu0 %v221
        %v292 = vpop.f32.mrf.mxu0
        %v293 = vadd.f32 %v212, %v292
        %v294 = vpop.f32.mrf.mxu0
        %295 = vdwg.mxu0
        %v296 = vxor.u32 %v293, 2147483648
        %v297 = vmul.f32 %v296, 1.442695
        %v298 = vpow.pop %v297
        %v299 = vadd.f32 %v298, 1.0
        %v300 = vrcp.pop %v299
        %v301 = vmul.f32 1.0, %v300
        %v302 = vlaneseq
        %v303 = vshrl.u32 %v302, 7
        %v304 = vsub.s32 0, %v303
        %v305 = vrot.slane %v301, %v304
        %307 = vbcast.lane.b32.xlu0 %v305, 256
        %v308 = vpop.permute.xlu0 %307
        %v311 = vunpack.c.l.s4 839922192
        %v312 = vunpack.c.0.s8 %v311
        %v313 = vlaneseq
        %v314 = vshrl.u32 %v313, 7
        %v315 = vsub.s32 %v312, %v314
        %v316 = vrot.slane %v308, %v315
        %v318 = vmul.f32 %v200, %v316
        %319 = vst [vmem:[%s199] sm:$0xff] %v318
        %s320 = sand.u32 %s97, 1
        %s321 = scalar_lea.sflag [#allocation4], %s320
        %s322 = sand.u32 %s97, 1
        %s323 = smul.addr %s322, 8
        %s324 = scalar_lea.vmem [#allocation7], %s323
        // Predicated region
        $region41: #{tpu_custom_call.1} parent=31 // pred_check
          %p325 = pneg %p107
        $region42: #{tpu_custom_call.1} parent=31 // pred_check_branch
          %327 = sbr.rel (%p325) target = $region44
        $region43: #{tpu_custom_call.1} parent=31 // pred_region
          %s329 = ssub.s32 128, 128
          %330 = vsyncadd %s321, %s329
          %s331 = smul.addr %s21, 2
          %s332 = smul.addr %s331, 64
          %s333 = scalar_lea.hbm %s3, %s332
          %s335 = sshll.u32 %s324, 4
          %s336 = int_to_ptr.vmem [resolvable:$true] %s335
          %338 = dma.vmem_to_hbm [thread:$0]  %s336, 128, %s333, %s321
        $region44: #{tpu_custom_call.1} parent=31 // pred_fallthru
          _
      $region32: #{tpu_custom_call.1} parent=5 // pred_fallthru
        _
      %p339 = scmp.le.s32.totalorder 2, %s16
      // Predicated region
      $region45: #{tpu_custom_call.1} parent=5 // pred_check
        %p340 = pneg %p339
      $region46: #{tpu_custom_call.1} parent=5 // pred_check_branch
        %342 = sbr.rel (%p340) target = $region48
      $region47: #{tpu_custom_call.1} parent=5 // pred_region
        %s343 = ssub.s32 %s16, 2
        // Predicated region
        $region49: #{tpu_custom_call.1} parent=47 // pred_check
          %p344 = pneg %p113
        $region50: #{tpu_custom_call.1} parent=47 // pred_check_branch
          %346 = sbr.rel (%p344) target = $region52
        $region51: #{tpu_custom_call.1} parent=47 // pred_region
          %s347 = sand.u32 %s98, 1
          %s348 = scalar_lea.sflag [#allocation4], %s347
          %s349 = sand.u32 %s98, 1
          %s350 = smul.addr %s349, 8
          %s351 = scalar_lea.vmem [#allocation7], %s350
          %352 = dma.done %s348, 128
        $region52: #{tpu_custom_call.1} parent=47 // pred_fallthru
          _
      $region48: #{tpu_custom_call.1} parent=5 // pred_fallthru
        _
    $region6: #{tpu_custom_call.1} parent=1 // loop_footer
      %s20 = sadd.s32 1, %s16
    $region7: #{tpu_custom_call.1} parent=1 // loop_footer_branch
      %15 = sbr.rel target = $region3
    $region8: #{tpu_custom_call.1} parent=1 // loop_exit
      _
    %353 = vsyncpa [#allocation3], 1
    %s354 = scalar_lea.sflag [#allocation3], 1
    %355 = vsyncpa %s354, 1
    %356 = vsyncpa [#allocation6], 1
    %357 = vsyncpa [#allocation4], 1
    %s358 = scalar_lea.sflag [#allocation4], 1
    %359 = vsyncpa %s358, 1

</llo_original>
